<compile_context>
chip_gen: v7x
topology: tpu7x:2x2x1
jax: 0.10.0
libtpu: 0.0.40
codegen_flags: <defaults>
</compile_context>

<pallas_src>
import jax
import jax.numpy as jnp
from jax.experimental import pallas as pl
from jax.experimental.pallas import tpu as pltpu


INPUT_DIM = 10
HIDDEN_DIM = 20
OUTPUT_DIM = 2

LANE = 128           # lane width; batch tiles are multiples of this
MAX_TILE_B = 8192    # sweet spot per review (2048-8192); VMEM is a non-issue

# Aligned parameter packing.
_P_ROWS = 32         # 4 sublane blocks of 8
_P_COLS = 32
_W2_ROW = 24         # multiple of 8 -> free vreg view for the W2 / b2 slices


def _cdiv(a, b):
    return (a + b - 1) // b


def _round_up(a, m):
    return _cdiv(a, m) * m


def _choose_tile_b(B):
    """Pick the batch tile (lane axis), a multiple of 128.

    Large tiles amortize the ~0.35 us/step pipeline overhead and lengthen the
    contiguous DMA runs of x^T; when there is enough work we keep >= 2 tiles
    so v7x's two TensorCores can split the "parallel" grid axis.  On 1-TC
    v5e/v6e the extra step for mid-sized batches costs ~a microsecond.
    """
    Bp = _round_up(max(B, 1), LANE)
    if Bp <= 2 * LANE:                      # tiny batch -> one grid step
        return Bp
    half = _round_up(_cdiv(Bp, 2), LANE)    # aim for 2 tiles (v7x megacore)
    return max(LANE, min(MAX_TILE_B, half))


def _mlp_kernel(xT_ref, w_ref, b_ref, outT_ref):
    """Fused MLP tile: relu(W1 @ xT + b1) -> W2 @ h + b2, batch on lanes."""
    x = xT_ref[...]                                            # [IN, TILE_B]

    # All parameter slices start at lane 0 / sublane multiple of 8 -> free views.
    w1 = w_ref[:HIDDEN_DIM, :INPUT_DIM]                        # [HID, IN]
    w2 = w_ref[_W2_ROW:_W2_ROW + OUTPUT_DIM, :HIDDEN_DIM]      # [OUT, HID]
    b1 = b_ref[:HIDDEN_DIM, :]                                 # [HID, 1]
    b2 = b_ref[_W2_ROW:_W2_ROW + OUTPUT_DIM, :]                # [OUT, 1]

    h = jnp.dot(w1, x, preferred_element_type=jnp.float32) + b1   # [HID, TILE_B]
    h = jnp.maximum(h, 0.0)
    outT_ref[...] = (jnp.dot(w2, h, preferred_element_type=jnp.float32)
                     + b2)                                         # [OUT, TILE_B]


@jax.jit
def mlp_forward_t(x_t, w_slab, b_slab):
    """Layout-native path: x_t [IN, B] -> y_t [OUT, B].  No host transposes."""
    in_dim, B = x_t.shape
    assert in_dim == INPUT_DIM

    tile_b = _choose_tile_b(B)
    n_tiles = _cdiv(B, tile_b)
    Bp = n_tiles * tile_b
    if Bp != B:                               # pad only when actually needed
        x_t = jnp.pad(x_t, ((0, 0), (0, Bp - B)))

    flops = 2 * Bp * (INPUT_DIM * HIDDEN_DIM + HIDDEN_DIM * OUTPUT_DIM)
    bytes_accessed = 4 * (INPUT_DIM * Bp + OUTPUT_DIM * Bp
                          + _P_ROWS * _P_COLS + _P_ROWS)

    y_t = pl.pallas_call(
        _mlp_kernel,
        out_shape=jax.ShapeDtypeStruct((OUTPUT_DIM, Bp), jnp.float32),
        grid=(n_tiles,),
        in_specs=[
            pl.BlockSpec((INPUT_DIM, tile_b), lambda i: (0, i)),   # batch-tiled x^T
            pl.BlockSpec((_P_ROWS, _P_COLS), lambda i: (0, 0)),    # resident weights
            pl.BlockSpec((_P_ROWS, 1), lambda i: (0, 0)),          # resident biases
        ],
        out_specs=pl.BlockSpec((OUTPUT_DIM, tile_b), lambda i: (0, i)),
        compiler_params=pltpu.CompilerParams(
            dimension_semantics=("parallel",)),   # shard batch tiles across TCs
        cost_estimate=pl.CostEstimate(flops=flops, transcendentals=0,
                                      bytes_accessed=bytes_accessed),
    )(x_t, w_slab, b_slab)

    # Padded columns hold W2@relu(b1)+b2 garbage -> must be dropped here.
    return y_t[:, :B]


@jax.jit
def mlp_forward(x, w_slab, b_slab):
    """PyTorch-layout wrapper: x [B, INPUT_DIM] -> y [B, OUTPUT_DIM].

    Equivalent to layer2(relu(layer1(x))).  Producers that can keep x in
    [IN, B] (and consume y in [OUT, B]) should call mlp_forward_t directly and
    skip these two host-side transposes entirely.
    """
    return jnp.transpose(mlp_forward_t(jnp.transpose(x), w_slab, b_slab))


def init_params(key):
    """PyTorch-Linear-style uniform init; weights kept in (out, in) orientation."""
    k1, k2, k3, k4 = jax.random.split(key, 4)
    bound1 = 1.0 / (INPUT_DIM ** 0.5)
    w1 = jax.random.uniform(k1, (HIDDEN_DIM, INPUT_DIM), jnp.float32, -bound1, bound1)
    b1 = jax.random.uniform(k2, (HIDDEN_DIM,), jnp.float32, -bound1, bound1)
    bound2 = 1.0 / (HIDDEN_DIM ** 0.5)
    w2 = jax.random.uniform(k3, (OUTPUT_DIM, HIDDEN_DIM), jnp.float32, -bound2, bound2)
    b2 = jax.random.uniform(k4, (OUTPUT_DIM,), jnp.float32, -bound2, bound2)
    return w1, b1, w2, b2


def pack_params(w1, b1, w2, b2):
    """Pack weights into an aligned [32, 32] slab and biases into [32, 1]."""
    w_slab = jnp.zeros((_P_ROWS, _P_COLS), jnp.float32)
    w_slab = w_slab.at[:HIDDEN_DIM, :INPUT_DIM].set(w1)
    w_slab = w_slab.at[_W2_ROW:_W2_ROW + OUTPUT_DIM, :HIDDEN_DIM].set(w2)

    b_slab = jnp.zeros((_P_ROWS, 1), jnp.float32)
    b_slab = b_slab.at[:HIDDEN_DIM, 0].set(b1)
    b_slab = b_slab.at[_W2_ROW:_W2_ROW + OUTPUT_DIM, 0].set(b2)
    return w_slab, b_slab


def _reference_forward(x, w1, b1, w2, b2):
    """Pure-JAX reference matching PyTorch: layer2(relu(layer1(x)))."""
    h = jnp.maximum(x @ w1.T + b1, 0.0)
    return h @ w2.T + b2


if __name__ == "__main__":
    root = jax.random.PRNGKey(0)
    k_param, k_x1, k_x2 = jax.random.split(root, 3)

    w1, b1, w2, b2 = init_params(k_param)
    w_slab, b_slab = pack_params(w1, b1, w2, b2)

    # B=200 exercises the pad + single-tile path; B=512 the 2-tile parallel grid.
    for B, kx in ((200, k_x1), (512, k_x2)):
        x = jax.random.normal(kx, (B, INPUT_DIM), dtype=jnp.float32)
        y = jax.block_until_ready(mlp_forward(x, w_slab, b_slab))
        ref = _reference_forward(x, w1, b1, w2, b2)
        assert y.shape == (B, OUTPUT_DIM)
        assert jnp.allclose(y, ref, atol=1e-5, rtol=1e-5)

    print("KERNEL_OK")
</pallas_src>

<mosaic_0001>
module attributes {stable_mosaic.version = 11 : i64} {
  func.func @_mlp_kernel(%arg0: i32, %arg1: memref<10x256xf32, #tpu.memory_space<vmem>>, %arg2: memref<32x32xf32, #tpu.memory_space<vmem>>, %arg3: memref<32x1xf32, #tpu.memory_space<vmem>>, %arg4: memref<2x256xf32, #tpu.memory_space<vmem>>) attributes {dimension_semantics = [#tpu.dimension_semantics<parallel>], iteration_bounds = array<i64: 1>, scalar_prefetch = 0 : i64, scratch_operands = 0 : i64, tpu.core_type = #tpu.core_type<tc>, window_params = [{transform_indices = @transform_0, window_bounds = array<i64: 10, 256>}, {pipeline_mode = #tpu.pipeline_mode<synchronous>, transform_indices = @transform_1, window_bounds = array<i64: 32, 32>}, {pipeline_mode = #tpu.pipeline_mode<synchronous>, transform_indices = @transform_2, window_bounds = array<i64: 32, 1>}, {transform_indices = @transform_3, window_bounds = array<i64: 2, 256>}]} {
    %c0 = arith.constant 0 : index
    %c0_0 = arith.constant 0 : index
    %0 = vector.load %arg1[%c0, %c0_0] : memref<10x256xf32, #tpu.memory_space<vmem>>, vector<10x256xf32>
    %c0_1 = arith.constant 0 : index
    %c0_2 = arith.constant 0 : index
    %1 = vector.load %arg2[%c0_1, %c0_2] : memref<32x32xf32, #tpu.memory_space<vmem>>, vector<20x10xf32>
    %c24 = arith.constant 24 : index
    %c0_3 = arith.constant 0 : index
    %2 = vector.load %arg2[%c24, %c0_3] : memref<32x32xf32, #tpu.memory_space<vmem>>, vector<2x20xf32>
    %c0_4 = arith.constant 0 : index
    %c0_5 = arith.constant 0 : index
    %3 = vector.load %arg3[%c0_4, %c0_5] : memref<32x1xf32, #tpu.memory_space<vmem>>, vector<20x1xf32>
    %c24_6 = arith.constant 24 : index
    %c0_7 = arith.constant 0 : index
    %4 = vector.load %arg3[%c24_6, %c0_7] : memref<32x1xf32, #tpu.memory_space<vmem>>, vector<2x1xf32>
    %cst = arith.constant dense<0.000000e+00> : vector<20x256xf32>
    %5 = tpu.matmul %1, %0, %cst {dimension_numbers = #tpu.dot_dimension_numbers<[1], [0], [0], [1], [0, 0, 1, 1], [], []>} : vector<20x10xf32>, vector<10x256xf32>, vector<20x256xf32> -> vector<20x256xf32>
    %6 = vector.broadcast %3 : vector<20x1xf32> to vector<20x256xf32>
    %7 = arith.addf %5, %6 : vector<20x256xf32>
    %cst_8 = arith.constant 0.000000e+00 : f32
    %8 = vector.broadcast %cst_8 : f32 to vector<20x256xf32>
    %9 = arith.maximumf %7, %8 : vector<20x256xf32>
    %cst_9 = arith.constant dense<0.000000e+00> : vector<2x256xf32>
    %10 = tpu.matmul %2, %9, %cst_9 {dimension_numbers = #tpu.dot_dimension_numbers<[1], [0], [0], [1], [0, 0, 1, 1], [], []>} : vector<2x20xf32>, vector<20x256xf32>, vector<2x256xf32> -> vector<2x256xf32>
    %11 = vector.broadcast %4 : vector<2x1xf32> to vector<2x256xf32>
    %12 = arith.addf %10, %11 : vector<2x256xf32>
    %c0_10 = arith.constant 0 : index
    %c0_11 = arith.constant 0 : index
    %13 = vector.load %arg4[%c0_10, %c0_11] : memref<2x256xf32, #tpu.memory_space<vmem>>, vector<2x256xf32>
    tpu.vector_store %arg4[%c0_10, %c0_11], %12 {strides = array<i32>} : memref<2x256xf32, #tpu.memory_space<vmem>>, vector<2x256xf32>,
    return
  }
  func.func @transform_0(%arg0: i32) -> (i32, i32) {
    %c0_i32 = arith.constant 0 : i32
    %c0_i32_0 = arith.constant 0 : i32
    return %c0_i32, %arg0 : i32, i32
  }
  func.func @transform_1(%arg0: i32) -> (i32, i32) {
    %c0_i32 = arith.constant 0 : i32
    %c0_i32_0 = arith.constant 0 : i32
    %c0_i32_1 = arith.constant 0 : i32
    return %c0_i32, %c0_i32_0 : i32, i32
  }
  func.func @transform_2(%arg0: i32) -> (i32, i32) {
    %c0_i32 = arith.constant 0 : i32
    %c0_i32_0 = arith.constant 0 : i32
    %c0_i32_1 = arith.constant 0 : i32
    return %c0_i32, %c0_i32_0 : i32, i32
  }
  func.func @transform_3(%arg0: i32) -> (i32, i32) {
    %c0_i32 = arith.constant 0 : i32
    %c0_i32_0 = arith.constant 0 : i32
    return %c0_i32, %arg0 : i32, i32
  }
}

</mosaic_0001>

<llo_original>
// kernel: mlp_forward_t.1
$region0: #{mlp_forward_t.1}
  #allocation0 [shape = 'u32[]', space=smem, size = 0x4, offset = 0x4, fixed_abs, tag = 'smem constant byte address 0x4 - core index']
  #allocation1 [shape = 'u32[144,128]{1,0:T(1,128)}', space=vmem, size = 0x12000, scoped, tag = 'internal scratch']
  %s0 = inlined_call_operand.vmem [shape: f32[10,256], index: 0, kind: input, shape index: {}]
  %s1 = inlined_call_operand.vmem [shape: f32[32,32], index: 1, kind: input, shape index: {}]
  %s2 = inlined_call_operand.vmem [shape: f32[32,1], index: 2, kind: input, shape index: {}]
  %s3 = inlined_call_operand.hbm [shape: f32[2,256], index: 3, kind: output, shape index: {}]
  %s4 = sld [smem:[#allocation0]]
  $region22: #{mlp_forward_t.1} parent=0
    _
  %s6 = ssub.s32 1, %s4
  %s7 = scalar_select 0, %s6, %s4
  $region1: #{mlp_forward_t.1} parent=0
    #allocation2 [shape = 'u8[2048]{0}', space=vmem, size = 0x800, scoped, tag = 'output window, operand 0, single buffered']
    #allocation3 [shape = 's32[1]{0}', space=sflag, size = 0x4, scoped, tag = 'scoped memory for mlp_forward_t.1']
    %8 = vsyncpa [#allocation3], 0
    // Predicated region
    $region2: #{mlp_forward_t.1} parent=1 // pred_check
      _
    $region3: #{mlp_forward_t.1} parent=1 // pred_check_branch
      %10 = sbr.rel (0) target = $region5
    $region4: #{mlp_forward_t.1} parent=1 // pred_region
      _
    $region5: #{mlp_forward_t.1} parent=1 // pred_fallthru
      _
    // Predicated region
    $region6: #{mlp_forward_t.1} parent=1 // pred_check
      _
    $region7: #{mlp_forward_t.1} parent=1 // pred_check_branch
      %12 = sbr.rel (0) target = $region9
    $region8: #{mlp_forward_t.1} parent=1 // pred_region
      _
    $region9: #{mlp_forward_t.1} parent=1 // pred_fallthru
      _
    // Predicated region
    $region10: #{mlp_forward_t.1} parent=1 // pred_check
      _
    $region11: #{mlp_forward_t.1} parent=1 // pred_check_branch
      %14 = sbr.rel (0) target = $region13
    $region12: #{mlp_forward_t.1} parent=1 // pred_region
      _
    $region13: #{mlp_forward_t.1} parent=1 // pred_fallthru
      _
    %v15 = vld [vmem:[%s0] sm:$0xff]
    %v16 = vld [vmem:[%s0 + $0x8] sm:$0xff]
    %v17 = vld [vmem:[%s0 + $0x10] sm:$0x3]
    %v18 = vld [vmem:[%s0 + $0x18] sm:$0x3]
    %v19 = vld [vmem:[%s1] sm:$0xff]
    %v20 = vld [vmem:[%s1 + $0x8] sm:$0xff]
    %v21 = vld [vmem:[%s1 + $0x10] sm:$0xf]
    %v22 = vld [vmem:[%s1 + $0x18] sm:$0x3]
    %v23 = vld [vmem:[%s2] sm:$0xff]
    %v24 = vld [vmem:[%s2 + $0x8] sm:$0xff]
    %v25 = vld [vmem:[%s2 + $0x10] sm:$0xf]
    %v26 = vld [vmem:[%s2 + $0x18] sm:$0x3]
    %28 = vset.pattern.permute.xlu0 0
    %29 = vperm.xlu0 %28, %v23
    %v30 = vpop.permute.xlu0 %29
    %33 = vset.pattern.permute.xlu0 0
    %34 = vperm.xlu0 %33, %v24
    %v35 = vpop.permute.xlu0 %34
    %38 = vset.pattern.permute.xlu0 0
    %39 = vperm.xlu0 %38, %v25
    %v40 = vpop.permute.xlu0 %39
    %vm42 = vcmask 80896
    %v44 = vsel %vm42, %v19, 0
    %v47 = vsel %vm42, %v20, 0
    %v50 = vsel %vm42, %v21, 0
    %vm52 = vcmask 1041408
    %v54 = vsel %vm52, %v17, 0
    %v57 = vsel %vm52, %v18, 0
    %59 = vmatprep.subr.mxu0 %v16
    %60 = vmatpush1.msra.mxu0 %v15
    %61 = vmatprep.subr.mxu0 %v57
    %62 = vmatpush1.msra.mxu0 %v54
    %63 = vmatprep.subr.mxu0 0.0
    %64 = vmatpush1.msra.mxu0 0.0
    %65 = vmatprep.subr.mxu0 0.0
    %66 = vmatpush1.msra.mxu0 0.0
    %67 = vmatprep.subr.mxu0 0.0
    %68 = vmatpush1.msra.mxu0 0.0
    %69 = vmatprep.subr.mxu0 0.0
    %70 = vmatpush1.msra.mxu0 0.0
    %71 = vmatprep.subr.mxu0 0.0
    %72 = vmatpush1.msra.mxu0 0.0
    %73 = vmatprep.subr.mxu0 0.0
    %74 = vmatpush1.msra.mxu0 0.0
    %75 = vmatprep.subr.mxu0 0.0
    %76 = vmatpush1.msra.mxu0 0.0
    %77 = vmatprep.subr.mxu0 0.0
    %78 = vmatpush1.msra.mxu0 0.0
    %79 = vmatprep.subr.mxu0 0.0
    %80 = vmatpush1.msra.mxu0 0.0
    %81 = vmatprep.subr.mxu0 0.0
    %82 = vmatpush1.msra.mxu0 0.0
    %83 = vmatprep.subr.mxu0 0.0
    %84 = vmatpush1.msra.mxu0 0.0
    %85 = vmatprep.subr.mxu0 0.0
    %86 = vmatpush1.msra.mxu0 0.0
    %87 = vmatprep.subr.mxu0 0.0
    %88 = vmatpush1.msra.mxu0 0.0
    %89 = vmatprep.subr.mxu0 0.0
    %90 = vmatpush1.msra.mxu0 0.0
    %91 = vmatprep.subr.mxu0 0.0
    %92 = vmatpush1.msra.mxu0 0.0
    %93 = vmatprep.subr.mxu0 0.0
    %94 = vmatpush1.msra.mxu0 0.0
    %95 = vmatprep.subr.mxu0 0.0
    %96 = vmatpush1.msra.mxu0 0.0
    %97 = vmatprep.subr.mxu0 0.0
    %98 = vmatpush1.msra.mxu0 0.0
    %99 = vmatprep.subr.mxu0 0.0
    %100 = vmatpush1.msra.mxu0 0.0
    %101 = vmatprep.subr.mxu0 0.0
    %102 = vmatpush1.msra.mxu0 0.0
    %103 = vmatprep.subr.mxu0 0.0
    %104 = vmatpush1.msra.mxu0 0.0
    %105 = vmatprep.subr.mxu0 0.0
    %106 = vmatpush1.msra.mxu0 0.0
    %107 = vmatprep.subr.mxu0 0.0
    %108 = vmatpush1.msra.mxu0 0.0
    %109 = vmatprep.subr.mxu0 0.0
    %110 = vmatpush1.msra.mxu0 0.0
    %111 = vmatprep.subr.mxu0 0.0
    %112 = vmatpush1.msra.mxu0 0.0
    %113 = vmatprep.subr.mxu0 0.0
    %114 = vmatpush1.msra.mxu0 0.0
    %115 = vmatprep.subr.mxu0 0.0
    %116 = vmatpush1.msra.mxu0 0.0
    %117 = vmatprep.subr.mxu0 0.0
    %118 = vmatpush1.msra.mxu0 0.0
    %119 = vmatprep.subr.mxu0 0.0
    %120 = vmatpush1.msra.mxu0 0.0
    %121 = vmatprep.subr.mxu0 0.0
    %122 = vmatpush1.msra.mxu0 0.0
    %123 = vmatprep.mubr.f32.mxu0 0.0
    %124 = vmatmul.mubr.f32.gmra.mrb[0].mxu0 %v44
    %v125 = vpop.f32.mrb[0].mxu0
    %v126 = vadd.f32 %v30, %v125
    %v127 = vpop.f32.mrb[0].mxu0
    %v128 = vadd.f32 %v30, %v127
    %129 = vmatprep.mubr.f32.mxu0 0.0
    %130 = vmatmul.mubr.f32.gmra.mrb[0].mxu0 %v47
    %v131 = vpop.f32.mrb[0].mxu0
    %v132 = vadd.f32 %v35, %v131
    %v133 = vpop.f32.mrb[0].mxu0
    %v134 = vadd.f32 %v35, %v133
    %135 = vmatprep.mubr.f32.mxu0 0.0
    %136 = vmatmul.mubr.f32.gmra.mrb[0].mxu0 %v50
    %v137 = vpop.f32.mrb[0].mxu0
    %v138 = vadd.f32 %v40, %v137
    %v139 = vpop.f32.mrb[0].mxu0
    %v140 = vadd.f32 %v40, %v139
    %141 = vdwg.mxu0
    %v142 = vmax.f32 %v126, 0.0
    %v143 = vmax.f32 %v128, 0.0
    %v144 = vmax.f32 %v132, 0.0
    %v145 = vmax.f32 %v134, 0.0
    %v146 = vmax.f32 %v138, 0.0
    %v147 = vmax.f32 %v140, 0.0
    %149 = vset.pattern.permute.xlu0 0
    %150 = vperm.xlu0 %149, %v26
    %v151 = vpop.permute.xlu0 %150
    %vm153 = vcmask 162816
    %v155 = vsel %vm153, %v22, 0
    %vm157 = vcmask 1043456
    %v159 = vsel %vm157, %v146, 0
    %v162 = vsel %vm157, %v147, 0
    %164 = vmatprep.subr.mxu0 %v143
    %165 = vmatpush1.msra.mxu0 %v142
    %166 = vmatprep.subr.mxu0 %v145
    %167 = vmatpush1.msra.mxu0 %v144
    %168 = vmatprep.subr.mxu0 %v162
    %169 = vmatpush1.msra.mxu0 %v159
    %170 = vmatprep.subr.mxu0 0.0
    %171 = vmatpush1.msra.mxu0 0.0
    %172 = vmatprep.subr.mxu0 0.0
    %173 = vmatpush1.msra.mxu0 0.0
    %174 = vmatprep.subr.mxu0 0.0
    %175 = vmatpush1.msra.mxu0 0.0
    %176 = vmatprep.subr.mxu0 0.0
    %177 = vmatpush1.msra.mxu0 0.0
    %178 = vmatprep.subr.mxu0 0.0
    %179 = vmatpush1.msra.mxu0 0.0
    %180 = vmatprep.subr.mxu0 0.0
    %181 = vmatpush1.msra.mxu0 0.0
    %182 = vmatprep.subr.mxu0 0.0
    %183 = vmatpush1.msra.mxu0 0.0
    %184 = vmatprep.subr.mxu0 0.0
    %185 = vmatpush1.msra.mxu0 0.0
    %186 = vmatprep.subr.mxu0 0.0
    %187 = vmatpush1.msra.mxu0 0.0
    %188 = vmatprep.subr.mxu0 0.0
    %189 = vmatpush1.msra.mxu0 0.0
    %190 = vmatprep.subr.mxu0 0.0
    %191 = vmatpush1.msra.mxu0 0.0
    %192 = vmatprep.subr.mxu0 0.0
    %193 = vmatpush1.msra.mxu0 0.0
    %194 = vmatprep.subr.mxu0 0.0
    %195 = vmatpush1.msra.mxu0 0.0
    %196 = vmatprep.subr.mxu0 0.0
    %197 = vmatpush1.msra.mxu0 0.0
    %198 = vmatprep.subr.mxu0 0.0
    %199 = vmatpush1.msra.mxu0 0.0
    %200 = vmatprep.subr.mxu0 0.0
    %201 = vmatpush1.msra.mxu0 0.0
    %202 = vmatprep.subr.mxu0 0.0
    %203 = vmatpush1.msra.mxu0 0.0
    %204 = vmatprep.subr.mxu0 0.0
    %205 = vmatpush1.msra.mxu0 0.0
    %206 = vmatprep.subr.mxu0 0.0
    %207 = vmatpush1.msra.mxu0 0.0
    %208 = vmatprep.subr.mxu0 0.0
    %209 = vmatpush1.msra.mxu0 0.0
    %210 = vmatprep.subr.mxu0 0.0
    %211 = vmatpush1.msra.mxu0 0.0
    %212 = vmatprep.subr.mxu0 0.0
    %213 = vmatpush1.msra.mxu0 0.0
    %214 = vmatprep.subr.mxu0 0.0
    %215 = vmatpush1.msra.mxu0 0.0
    %216 = vmatprep.subr.mxu0 0.0
    %217 = vmatpush1.msra.mxu0 0.0
    %218 = vmatprep.subr.mxu0 0.0
    %219 = vmatpush1.msra.mxu0 0.0
    %220 = vmatprep.subr.mxu0 0.0
    %221 = vmatpush1.msra.mxu0 0.0
    %222 = vmatprep.subr.mxu0 0.0
    %223 = vmatpush1.msra.mxu0 0.0
    %224 = vmatprep.subr.mxu0 0.0
    %225 = vmatpush1.msra.mxu0 0.0
    %226 = vmatprep.subr.mxu0 0.0
    %227 = vmatpush1.msra.mxu0 0.0
    %228 = vmatprep.mubr.f32.mxu0 0.0
    %229 = vmatmul.mubr.f32.gmra.mrb[0].mxu0 %v155
    %v230 = vpop.f32.mrb[0].mxu0
    %v231 = vadd.f32 %v151, %v230
    %v232 = vpop.f32.mrb[0].mxu0
    %v233 = vadd.f32 %v151, %v232
    %234 = vdwg.mxu0
    %v237 = vcombine.low %v231, %v233
    %v239 = vunpack.c.l.s4 1983009808
    %v240 = vunpack.c.0.s8 %v239
    %v241 = vlaneseq
    %v242 = vshrl.u32 %v241, 7
    %v243 = vsub.s32 %v240, %v242
    %v244 = vrot.slane %v237, %v243
    %246 = vst [vmem:[#allocation2] sm:$0xf] %v244
    // Predicated region
    $region14: #{mlp_forward_t.1} parent=1 // pred_check
      _
    $region15: #{mlp_forward_t.1} parent=1 // pred_check_branch
      %248 = sbr.rel (0) target = $region17
    $region16: #{mlp_forward_t.1} parent=1 // pred_region
      %s250 = ssub.s32 64, 64
      %251 = vsyncadd [#allocation3], %s250
      %s253 = sshll.u32 [#allocation2], 4
      %s254 = int_to_ptr.vmem [resolvable:$true] %s253
      %256 = dma.vmem_to_hbm [thread:$0]  %s254, 64, %s3, [#allocation3]
    $region17: #{mlp_forward_t.1} parent=1 // pred_fallthru
      _
    // Predicated region
    $region18: #{mlp_forward_t.1} parent=1 // pred_check
      _
    $region19: #{mlp_forward_t.1} parent=1 // pred_check_branch
      %258 = sbr.rel (0) target = $region21
    $region20: #{mlp_forward_t.1} parent=1 // pred_region
      %259 = dma.done [#allocation3], 64
    $region21: #{mlp_forward_t.1} parent=1 // pred_fallthru
      _
    %260 = vsyncpa [#allocation3], 1

</llo_original>
